<compile_context>
chip_gen: v7x
topology: tpu7x:2x2x1
jax: 0.10.0
libtpu: 0.0.40
codegen_flags: <defaults>
</compile_context>

<pallas_src>
import functools

import jax
import jax.numpy as jnp
from jax import lax
from jax.experimental import pallas as pl
from jax.experimental.pallas import tpu as pltpu


def _round_up(n, m):
    return (n + m - 1) // m * m


# ---------------------------------------------------------------------------
# Kernel factory (layer count / conv geometry / MXU dtype baked in statically)
# ---------------------------------------------------------------------------
def _make_temporal_conv_block_kernel(n_layers, kernel_size, dilation, pad,
                                     has_skip, mxu_dtype):
    K = kernel_size

    def kernel(*refs):
        # PrefetchScalarGridSpec arg order: scalar-prefetch refs, inputs,
        # outputs, scratch.
        alphas_ref = refs[0]                       # SMEM (n_layers,) f32
        x_ref = refs[1]                            # (1, T, Wp) f32
        layer_refs = refs[2:2 + 2 * n_layers]      # (w (K,Wp,Wp), b (1,Wp)) per layer
        idx = 2 + 2 * n_layers
        if has_skip:
            sw_ref = refs[idx]                     # (Wp, Wp) mxu_dtype
            sb_ref = refs[idx + 1]                 # (1, Wp) f32
            idx += 2
        out_ref = refs[idx]                        # (1, T, Wp) f32
        hbuf = refs[idx + 1]                       # VMEM scratch (pad+T, Wp) mxu_dtype

        T = x_ref.shape[1]
        Wp = x_ref.shape[2]

        x = x_ref[0]                               # (T, Wp) f32

        # ---- skip path: 1x1 conv == one lane-dense matmul (or identity) ----
        if has_skip:
            skip = jnp.dot(x.astype(mxu_dtype), sw_ref[...],
                           preferred_element_type=jnp.float32) + sb_ref[...]
        else:
            skip = x                               # identity (same Wp channels)

        # ---- causal left pad lives in the persistent VMEM scratch ----
        # rows [0, pad) stay zero, rows [pad, pad+T) hold the live activation.
        if pad > 0:
            hbuf[pl.ds(0, pad), :] = jnp.zeros((pad, Wp), mxu_dtype)
        hbuf[pl.ds(pad, T), :] = x.astype(mxu_dtype)

        h = None
        for l in range(n_layers):
            w_ref = layer_refs[2 * l]              # (K, Wp, Wp) mxu_dtype
            b_ref = layer_refs[2 * l + 1]          # (1, Wp) f32
            # K accumulating per-tap matmuls: y = sum_k shift(h, k*dil) @ w_k.
            # No im2col concat, no padded-activation copy; taps read the ref.
            acc = jnp.zeros((T, Wp), jnp.float32)
            for k in range(K):
                tap = hbuf[pl.ds(k * dilation, T), :]      # (T, Wp) mxu_dtype
                acc = acc + jnp.dot(tap, w_ref[k],
                                    preferred_element_type=jnp.float32)
            y = acc + b_ref[...]
            # PReLU (single learnable scalar per layer) in f32 on the VPU.
            alpha = alphas_ref[l]
            y = jnp.where(y >= 0.0, y, alpha * y)
            if l + 1 < n_layers:
                hbuf[pl.ds(pad, T), :] = y.astype(mxu_dtype)
            else:
                h = y                              # last layer stays f32

        out_ref[0] = (skip + h).astype(out_ref.dtype)

    return kernel


# ---------------------------------------------------------------------------
# One-time parameter re-layout (hoisted out of the jitted forward)
# ---------------------------------------------------------------------------
def prepare_params(conv_params, skip_params, alphas, *, input_dim, hidden_dim,
                   mxu_dtype=jnp.bfloat16):
    """(C_out, C_in, K) conv weights -> per-tap (K, Wp, Wp) lane-dense slices,
    with every channel dim zero-padded to a common 128-multiple Wp."""
    Wp = _round_up(max(input_dim, hidden_dim), 128)

    prepped_layers = []
    for (w, b) in conv_params:
        c_out, c_in, k = w.shape
        wt = jnp.transpose(w, (2, 1, 0)).astype(mxu_dtype)        # (K, C_in, C_out)
        wp = jnp.zeros((k, Wp, Wp), mxu_dtype).at[:, :c_in, :c_out].set(wt)
        bp = jnp.zeros((1, Wp), jnp.float32).at[0, :c_out].set(
            b.astype(jnp.float32))
        prepped_layers.append((wp, bp))

    if skip_params is not None:
        w_s, b_s = skip_params                                    # (H, C_in, 1), (H,)
        c_out, c_in = w_s.shape[0], w_s.shape[1]
        swp = jnp.zeros((Wp, Wp), mxu_dtype).at[:c_in, :c_out].set(
            jnp.transpose(w_s[:, :, 0], (1, 0)).astype(mxu_dtype))
        sbp = jnp.zeros((1, Wp), jnp.float32).at[0, :c_out].set(
            b_s.astype(jnp.float32))
        skip_prepped = (swp, sbp)
    else:
        skip_prepped = None

    alphas_p = jnp.asarray(alphas, jnp.float32).reshape(len(conv_params))
    return tuple(prepped_layers), skip_prepped, alphas_p, Wp


# ---------------------------------------------------------------------------
# Forward wrapper
# ---------------------------------------------------------------------------
@functools.partial(jax.jit, static_argnames=("kernel_size", "dilation",
                                              "padding", "hidden_dim",
                                              "mxu_dtype"))
def temporal_conv_block_forward(x, prepped_layers, skip_prepped, alphas, *,
                                kernel_size, dilation, padding, hidden_dim,
                                mxu_dtype=jnp.bfloat16):
    """x: (B, C_in, T) f32 -> (B, hidden_dim, T), matching the PyTorch module."""
    B, c_in0, T = x.shape
    n_layers = len(prepped_layers)
    K = kernel_size

    # The PyTorch module's residual add only type-checks when the causal conv
    # preserves sequence length.
    assert padding == dilation * (K - 1), (
        "TemporalConvBlock requires padding == dilation*(kernel_size-1).")

    has_skip = skip_prepped is not None
    if not has_skip:
        assert c_in0 == hidden_dim, "identity skip requires input_dim == hidden_dim"
    Wp = prepped_layers[0][0].shape[1]

    # NCH -> NHC (channel-last, lane-dense) + zero-pad channels to Wp.
    # TODO(synk): if the surrounding model is kept channel-last, this transpose
    # and the matching output transpose disappear entirely.
    x_t = jnp.transpose(x, (0, 2, 1)).astype(jnp.float32)         # (B, T, C_in)
    if Wp > c_in0:
        x_t = jnp.pad(x_t, ((0, 0), (0, 0), (0, Wp - c_in0)))     # (B, T, Wp)

    args = [alphas, x_t]
    in_specs = [pl.BlockSpec((1, T, Wp), lambda b, a: (b, 0, 0))]
    for (w, bb) in prepped_layers:
        args += [w, bb]
        in_specs += [pl.BlockSpec(w.shape, lambda b, a: (0, 0, 0)),
                     pl.BlockSpec(bb.shape, lambda b, a: (0, 0))]
    if has_skip:
        sw, sb = skip_prepped
        args += [sw, sb]
        in_specs += [pl.BlockSpec(sw.shape, lambda b, a: (0, 0)),
                     pl.BlockSpec(sb.shape, lambda b, a: (0, 0))]

    # Explicit VMEM budget (weights are fetched once; x/out blocks are
    # double-buffered by the pipeline).
    esize = jnp.dtype(mxu_dtype).itemsize
    wbytes = sum(int(w.size) * esize + int(bb.size) * 4
                 for (w, bb) in prepped_layers)
    if has_skip:
        wbytes += int(sw.size) * esize + int(sb.size) * 4
    block_bytes = 2 * 2 * (T * Wp * 4)                  # x + out, double-buffered
    scratch_bytes = (padding + T) * Wp * esize
    est = block_bytes + 2 * wbytes + scratch_bytes
    vmem_limit = int(min(max(4 * est, 16 * 2 ** 20), 64 * 2 ** 20))

    kernel = _make_temporal_conv_block_kernel(n_layers, K, dilation, padding,
                                              has_skip, mxu_dtype)
    y = pl.pallas_call(
        kernel,
        out_shape=jax.ShapeDtypeStruct((B, T, Wp), jnp.float32),
        grid_spec=pltpu.PrefetchScalarGridSpec(
            num_scalar_prefetch=1,
            grid=(B,),
            in_specs=in_specs,
            out_specs=pl.BlockSpec((1, T, Wp), lambda b, a: (b, 0, 0)),
            scratch_shapes=[pltpu.VMEM((padding + T, Wp), mxu_dtype)]),
        compiler_params=pltpu.CompilerParams(
            dimension_semantics=("parallel",),
            vmem_limit_bytes=vmem_limit),
    )(*args)

    # Drop the channel padding, back to the module's NCH layout.
    return jnp.transpose(y[:, :, :hidden_dim], (0, 2, 1))


# ---------------------------------------------------------------------------
# Pure-JAX reference (mirrors PyTorch CasualConv1d + PReLU + skip).
# mxu_dtype=bfloat16 emulates the kernel's bf16 MXU operands for tight checks.
# ---------------------------------------------------------------------------
def temporal_conv_block_reference(x, conv_params, alphas, skip_params, *,
                                  kernel_size, dilation, padding,
                                  mxu_dtype=jnp.float32):
    cast = lambda a: a.astype(mxu_dtype)
    if skip_params is None:
        skip = x
    else:
        w_s, b_s = skip_params
        skip = jnp.einsum('bcl,oc->bol', cast(x), cast(w_s[:, :, 0]),
                          preferred_element_type=jnp.float32,
                          precision=lax.Precision.HIGHEST) + b_s[None, :, None]
    h = x
    for (w, b), a in zip(conv_params, list(alphas)):
        y = lax.conv_general_dilated(
            cast(h), cast(w), window_strides=(1,),
            padding=[(padding, padding)], rhs_dilation=(dilation,),
            dimension_numbers=('NCH', 'OIH', 'NCH'),
            preferred_element_type=jnp.float32,
            precision=lax.Precision.HIGHEST)
        y = y + b[None, :, None].astype(jnp.float32)
        if padding > 0:
            y = y[:, :, : y.shape[2] - padding]      # CasualConv1d trim
        h = jnp.where(y >= 0, y, a * y)              # PReLU in f32
    return skip + h


# ---------------------------------------------------------------------------
# Parameter init (PyTorch-style uniform bounds), deterministic.
# ---------------------------------------------------------------------------
def init_params(key, input_dim, hidden_dim, kernel_size, n_layers):
    conv_params = []
    channels = [input_dim] + [hidden_dim] * n_layers
    for c_in, c_out in zip(channels[:-1], channels[1:]):
        key, k1, k2 = jax.random.split(key, 3)
        bound = 1.0 / jnp.sqrt(c_in * kernel_size)
        w = jax.random.uniform(k1, (c_out, c_in, kernel_size), jnp.float32,
                               -bound, bound)
        b = jax.random.uniform(k2, (c_out,), jnp.float32, -bound, bound)
        conv_params.append((w, b))

    key, ka = jax.random.split(key)
    alphas = jax.random.uniform(ka, (n_layers,), jnp.float32, 0.1, 0.4)

    if input_dim != hidden_dim:
        key, k1, k2 = jax.random.split(key, 3)
        bound = 1.0 / jnp.sqrt(input_dim)
        w_s = jax.random.uniform(k1, (hidden_dim, input_dim, 1), jnp.float32,
                                 -bound, bound)
        b_s = jax.random.uniform(k2, (hidden_dim,), jnp.float32, -bound, bound)
        skip_params = (w_s, b_s)
    else:
        skip_params = None
    return tuple(conv_params), alphas, skip_params


if __name__ == "__main__":
    B, T = 2, 16
    input_dim, hidden_dim = 4, 32
    kernel_size, dilation, n_layers = 3, 2, 2
    padding = dilation * (kernel_size - 1)        # causal, length preserving

    key = jax.random.PRNGKey(0)
    key, kx = jax.random.split(key)
    x = jax.random.normal(kx, (B, input_dim, T), jnp.float32)
    conv_params, alphas, skip_params = init_params(key, input_dim, hidden_dim,
                                                   kernel_size, n_layers)

    # --- bf16 MXU operands (production config) ---------------------------
    prepped, skip_p, alphas_p, _ = prepare_params(
        conv_params, skip_params, alphas, input_dim=input_dim,
        hidden_dim=hidden_dim, mxu_dtype=jnp.bfloat16)
    out = temporal_conv_block_forward(
        x, prepped, skip_p, alphas_p, kernel_size=kernel_size,
        dilation=dilation, padding=padding, hidden_dim=hidden_dim,
        mxu_dtype=jnp.bfloat16)
    out = jax.block_until_ready(out)
    assert out.shape == (B, hidden_dim, T), out.shape
    ref_bf16 = temporal_conv_block_reference(
        x, conv_params, alphas, skip_params, kernel_size=kernel_size,
        dilation=dilation, padding=padding, mxu_dtype=jnp.bfloat16)
    assert jnp.allclose(out, ref_bf16, atol=1e-2, rtol=1e-2), (
        float(jnp.max(jnp.abs(out - ref_bf16))))

    # --- f32 MXU operands (strict-parity mode) ----------------------------
    prepped32, skip32, alphas32, _ = prepare_params(
        conv_params, skip_params, alphas, input_dim=input_dim,
        hidden_dim=hidden_dim, mxu_dtype=jnp.float32)
    out32 = temporal_conv_block_forward(
        x, prepped32, skip32, alphas32, kernel_size=kernel_size,
        dilation=dilation, padding=padding, hidden_dim=hidden_dim,
        mxu_dtype=jnp.float32)
    out32 = jax.block_until_ready(out32)
    ref32 = temporal_conv_block_reference(
        x, conv_params, alphas, skip_params, kernel_size=kernel_size,
        dilation=dilation, padding=padding, mxu_dtype=jnp.float32)
    assert jnp.allclose(out32, ref32, atol=1e-3, rtol=1e-3), (
        float(jnp.max(jnp.abs(out32 - ref32))))

    # --- identity-skip coverage (input_dim == hidden_dim) ------------------
    conv2, alphas2, skip2 = init_params(jax.random.PRNGKey(1), 8, 8,
                                        kernel_size, n_layers)
    assert skip2 is None
    x2 = jax.random.normal(jax.random.PRNGKey(2), (B, 8, T), jnp.float32)
    p2, s2, a2, _ = prepare_params(conv2, skip2, alphas2, input_dim=8,
                                   hidden_dim=8, mxu_dtype=jnp.float32)
    out2 = temporal_conv_block_forward(
        x2, p2, s2, a2, kernel_size=kernel_size, dilation=dilation,
        padding=padding, hidden_dim=8, mxu_dtype=jnp.float32)
    out2 = jax.block_until_ready(out2)
    ref2 = temporal_conv_block_reference(
        x2, conv2, alphas2, skip2, kernel_size=kernel_size,
        dilation=dilation, padding=padding, mxu_dtype=jnp.float32)
    assert jnp.allclose(out2, ref2, atol=1e-3, rtol=1e-3), (
        float(jnp.max(jnp.abs(out2 - ref2))))

    print("KERNEL_OK")
</pallas_src>

<mosaic_0001>
module attributes {stable_mosaic.version = 11 : i64} {
  func.func @kernel(%arg0: i32, %arg1: memref<2xf32, #tpu.memory_space<smem>>, %arg2: memref<1x16x128xf32, #tpu.memory_space<vmem>>, %arg3: memref<3x128x128xbf16, #tpu.memory_space<vmem>>, %arg4: memref<1x128xf32, #tpu.memory_space<vmem>>, %arg5: memref<3x128x128xbf16, #tpu.memory_space<vmem>>, %arg6: memref<1x128xf32, #tpu.memory_space<vmem>>, %arg7: memref<128x128xbf16, #tpu.memory_space<vmem>>, %arg8: memref<1x128xf32, #tpu.memory_space<vmem>>, %arg9: memref<1x16x128xf32, #tpu.memory_space<vmem>>, %arg10: memref<20x128xbf16, #tpu.memory_space<vmem>>) attributes {dimension_semantics = [#tpu.dimension_semantics<parallel>], iteration_bounds = array<i64: 2>, scalar_prefetch = 1 : i64, scratch_operands = 1 : i64, tpu.core_type = #tpu.core_type<tc>, window_params = [{transform_indices = @transform_0, window_bounds = array<i64: 1, 16, 128>}, {pipeline_mode = #tpu.pipeline_mode<synchronous>, transform_indices = @transform_1, window_bounds = array<i64: 3, 128, 128>}, {pipeline_mode = #tpu.pipeline_mode<synchronous>, transform_indices = @transform_2, window_bounds = array<i64: 1, 128>}, {pipeline_mode = #tpu.pipeline_mode<synchronous>, transform_indices = @transform_3, window_bounds = array<i64: 3, 128, 128>}, {pipeline_mode = #tpu.pipeline_mode<synchronous>, transform_indices = @transform_4, window_bounds = array<i64: 1, 128>}, {pipeline_mode = #tpu.pipeline_mode<synchronous>, transform_indices = @transform_5, window_bounds = array<i64: 128, 128>}, {pipeline_mode = #tpu.pipeline_mode<synchronous>, transform_indices = @transform_6, window_bounds = array<i64: 1, 128>}, {transform_indices = @transform_7, window_bounds = array<i64: 1, 16, 128>}]} {
    %c0 = arith.constant 0 : index
    %c0_0 = arith.constant 0 : index
    %c0_1 = arith.constant 0 : index
    %0 = vector.load %arg2[%c0, %c0_0, %c0_1] : memref<1x16x128xf32, #tpu.memory_space<vmem>>, vector<1x16x128xf32>
    %1 = vector.shape_cast %0 : vector<1x16x128xf32> to vector<16x128xf32>
    %2 = arith.truncf %1 : vector<16x128xf32> to vector<16x128xbf16>
    %c0_2 = arith.constant 0 : index
    %c0_3 = arith.constant 0 : index
    %3 = vector.load %arg7[%c0_2, %c0_3] : memref<128x128xbf16, #tpu.memory_space<vmem>>, vector<128x128xbf16>
    %cst = arith.constant dense<0.000000e+00> : vector<16x128xf32>
    %4 = tpu.matmul %2, %3, %cst {dimension_numbers = #tpu.dot_dimension_numbers<[1], [0], [0], [1], [0, 0, 1, 1], [], []>} : vector<16x128xbf16>, vector<128x128xbf16>, vector<16x128xf32> -> vector<16x128xf32>
    %c0_4 = arith.constant 0 : index
    %c0_5 = arith.constant 0 : index
    %5 = vector.load %arg8[%c0_4, %c0_5] : memref<1x128xf32, #tpu.memory_space<vmem>>, vector<1x128xf32>
    %6 = vector.broadcast %5 : vector<1x128xf32> to vector<16x128xf32>
    %7 = arith.addf %4, %6 : vector<16x128xf32>
    %cst_6 = arith.constant 0.000000e+00 : bf16
    %8 = vector.broadcast %cst_6 : bf16 to vector<4x128xbf16>
    %c0_7 = arith.constant 0 : index
    %c0_8 = arith.constant 0 : index
    %9 = vector.load %arg10[%c0_7, %c0_8] : memref<20x128xbf16, #tpu.memory_space<vmem>>, vector<4x128xbf16>
    tpu.vector_store %arg10[%c0_7, %c0_8], %8 {strides = array<i32>} : memref<20x128xbf16, #tpu.memory_space<vmem>>, vector<4x128xbf16>,
    %10 = arith.truncf %1 : vector<16x128xf32> to vector<16x128xbf16>
    %c4 = arith.constant 4 : index
    %c0_9 = arith.constant 0 : index
    %11 = vector.load %arg10[%c4, %c0_9] : memref<20x128xbf16, #tpu.memory_space<vmem>>, vector<16x128xbf16>
    tpu.vector_store %arg10[%c4, %c0_9], %10 {strides = array<i32>} : memref<20x128xbf16, #tpu.memory_space<vmem>>, vector<16x128xbf16>,
    %cst_10 = arith.constant 0.000000e+00 : f32
    %12 = vector.broadcast %cst_10 : f32 to vector<16x128xf32>
    %c0_11 = arith.constant 0 : index
    %c0_12 = arith.constant 0 : index
    %13 = vector.load %arg10[%c0_11, %c0_12] : memref<20x128xbf16, #tpu.memory_space<vmem>>, vector<16x128xbf16>
    %c0_13 = arith.constant 0 : index
    %c0_14 = arith.constant 0 : index
    %c0_15 = arith.constant 0 : index
    %14 = vector.load %arg3[%c0_13, %c0_14, %c0_15] : memref<3x128x128xbf16, #tpu.memory_space<vmem>>, vector<1x128x128xbf16>
    %15 = vector.shape_cast %14 : vector<1x128x128xbf16> to vector<128x128xbf16>
    %cst_16 = arith.constant dense<0.000000e+00> : vector<16x128xf32>
    %16 = tpu.matmul %13, %15, %cst_16 {dimension_numbers = #tpu.dot_dimension_numbers<[1], [0], [0], [1], [0, 0, 1, 1], [], []>} : vector<16x128xbf16>, vector<128x128xbf16>, vector<16x128xf32> -> vector<16x128xf32>
    %17 = arith.addf %12, %16 : vector<16x128xf32>
    %c2 = arith.constant 2 : index
    %c0_17 = arith.constant 0 : index
    %18 = vector.load %arg10[%c2, %c0_17] : memref<20x128xbf16, #tpu.memory_space<vmem>>, vector<16x128xbf16>
    %c1 = arith.constant 1 : index
    %c0_18 = arith.constant 0 : index
    %c0_19 = arith.constant 0 : index
    %19 = vector.load %arg3[%c1, %c0_18, %c0_19] : memref<3x128x128xbf16, #tpu.memory_space<vmem>>, vector<1x128x128xbf16>
    %20 = vector.shape_cast %19 : vector<1x128x128xbf16> to vector<128x128xbf16>
    %cst_20 = arith.constant dense<0.000000e+00> : vector<16x128xf32>
    %21 = tpu.matmul %18, %20, %cst_20 {dimension_numbers = #tpu.dot_dimension_numbers<[1], [0], [0], [1], [0, 0, 1, 1], [], []>} : vector<16x128xbf16>, vector<128x128xbf16>, vector<16x128xf32> -> vector<16x128xf32>
    %22 = arith.addf %17, %21 : vector<16x128xf32>
    %c4_21 = arith.constant 4 : index
    %c0_22 = arith.constant 0 : index
    %23 = vector.load %arg10[%c4_21, %c0_22] : memref<20x128xbf16, #tpu.memory_space<vmem>>, vector<16x128xbf16>
    %c2_23 = arith.constant 2 : index
    %c0_24 = arith.constant 0 : index
    %c0_25 = arith.constant 0 : index
    %24 = vector.load %arg3[%c2_23, %c0_24, %c0_25] : memref<3x128x128xbf16, #tpu.memory_space<vmem>>, vector<1x128x128xbf16>
    %25 = vector.shape_cast %24 : vector<1x128x128xbf16> to vector<128x128xbf16>
    %cst_26 = arith.constant dense<0.000000e+00> : vector<16x128xf32>
    %26 = tpu.matmul %23, %25, %cst_26 {dimension_numbers = #tpu.dot_dimension_numbers<[1], [0], [0], [1], [0, 0, 1, 1], [], []>} : vector<16x128xbf16>, vector<128x128xbf16>, vector<16x128xf32> -> vector<16x128xf32>
    %27 = arith.addf %22, %26 : vector<16x128xf32>
    %c0_27 = arith.constant 0 : index
    %c0_28 = arith.constant 0 : index
    %28 = vector.load %arg4[%c0_27, %c0_28] : memref<1x128xf32, #tpu.memory_space<vmem>>, vector<1x128xf32>
    %29 = vector.broadcast %28 : vector<1x128xf32> to vector<16x128xf32>
    %30 = arith.addf %27, %29 : vector<16x128xf32>
    %c0_29 = arith.constant 0 : index
    %31 = memref.load %arg1[%c0_29] : memref<2xf32, #tpu.memory_space<smem>>
    %cst_30 = arith.constant 0.000000e+00 : f32
    %32 = vector.broadcast %cst_30 : f32 to vector<16x128xf32>
    %33 = arith.cmpf oge, %30, %32 : vector<16x128xf32>
    %34 = vector.broadcast %31 : f32 to vector<16x128xf32>
    %35 = arith.mulf %34, %30 : vector<16x128xf32>
    %36 = arith.select %33, %30, %35 : vector<16x128xi1>, vector<16x128xf32>
    %37 = arith.truncf %36 : vector<16x128xf32> to vector<16x128xbf16>
    %c4_31 = arith.constant 4 : index
    %c0_32 = arith.constant 0 : index
    %38 = vector.load %arg10[%c4_31, %c0_32] : memref<20x128xbf16, #tpu.memory_space<vmem>>, vector<16x128xbf16>
    tpu.vector_store %arg10[%c4_31, %c0_32], %37 {strides = array<i32>} : memref<20x128xbf16, #tpu.memory_space<vmem>>, vector<16x128xbf16>,
    %cst_33 = arith.constant 0.000000e+00 : f32
    %39 = vector.broadcast %cst_33 : f32 to vector<16x128xf32>
    %c0_34 = arith.constant 0 : index
    %c0_35 = arith.constant 0 : index
    %40 = vector.load %arg10[%c0_34, %c0_35] : memref<20x128xbf16, #tpu.memory_space<vmem>>, vector<16x128xbf16>
    %c0_36 = arith.constant 0 : index
    %c0_37 = arith.constant 0 : index
    %c0_38 = arith.constant 0 : index
    %41 = vector.load %arg5[%c0_36, %c0_37, %c0_38] : memref<3x128x128xbf16, #tpu.memory_space<vmem>>, vector<1x128x128xbf16>
    %42 = vector.shape_cast %41 : vector<1x128x128xbf16> to vector<128x128xbf16>
    %cst_39 = arith.constant dense<0.000000e+00> : vector<16x128xf32>
    %43 = tpu.matmul %40, %42, %cst_39 {dimension_numbers = #tpu.dot_dimension_numbers<[1], [0], [0], [1], [0, 0, 1, 1], [], []>} : vector<16x128xbf16>, vector<128x128xbf16>, vector<16x128xf32> -> vector<16x128xf32>
    %44 = arith.addf %39, %43 : vector<16x128xf32>
    %c2_40 = arith.constant 2 : index
    %c0_41 = arith.constant 0 : index
    %45 = vector.load %arg10[%c2_40, %c0_41] : memref<20x128xbf16, #tpu.memory_space<vmem>>, vector<16x128xbf16>
    %c1_42 = arith.constant 1 : index
    %c0_43 = arith.constant 0 : index
    %c0_44 = arith.constant 0 : index
    %46 = vector.load %arg5[%c1_42, %c0_43, %c0_44] : memref<3x128x128xbf16, #tpu.memory_space<vmem>>, vector<1x128x128xbf16>
    %47 = vector.shape_cast %46 : vector<1x128x128xbf16> to vector<128x128xbf16>
    %cst_45 = arith.constant dense<0.000000e+00> : vector<16x128xf32>
    %48 = tpu.matmul %45, %47, %cst_45 {dimension_numbers = #tpu.dot_dimension_numbers<[1], [0], [0], [1], [0, 0, 1, 1], [], []>} : vector<16x128xbf16>, vector<128x128xbf16>, vector<16x128xf32> -> vector<16x128xf32>
    %49 = arith.addf %44, %48 : vector<16x128xf32>
    %c4_46 = arith.constant 4 : index
    %c0_47 = arith.constant 0 : index
    %50 = vector.load %arg10[%c4_46, %c0_47] : memref<20x128xbf16, #tpu.memory_space<vmem>>, vector<16x128xbf16>
    %c2_48 = arith.constant 2 : index
    %c0_49 = arith.constant 0 : index
    %c0_50 = arith.constant 0 : index
    %51 = vector.load %arg5[%c2_48, %c0_49, %c0_50] : memref<3x128x128xbf16, #tpu.memory_space<vmem>>, vector<1x128x128xbf16>
    %52 = vector.shape_cast %51 : vector<1x128x128xbf16> to vector<128x128xbf16>
    %cst_51 = arith.constant dense<0.000000e+00> : vector<16x128xf32>
    %53 = tpu.matmul %50, %52, %cst_51 {dimension_numbers = #tpu.dot_dimension_numbers<[1], [0], [0], [1], [0, 0, 1, 1], [], []>} : vector<16x128xbf16>, vector<128x128xbf16>, vector<16x128xf32> -> vector<16x128xf32>
    %54 = arith.addf %49, %53 : vector<16x128xf32>
    %c0_52 = arith.constant 0 : index
    %c0_53 = arith.constant 0 : index
    %55 = vector.load %arg6[%c0_52, %c0_53] : memref<1x128xf32, #tpu.memory_space<vmem>>, vector<1x128xf32>
    %56 = vector.broadcast %55 : vector<1x128xf32> to vector<16x128xf32>
    %57 = arith.addf %54, %56 : vector<16x128xf32>
    %c1_54 = arith.constant 1 : index
    %58 = memref.load %arg1[%c1_54] : memref<2xf32, #tpu.memory_space<smem>>
    %cst_55 = arith.constant 0.000000e+00 : f32
    %59 = vector.broadcast %cst_55 : f32 to vector<16x128xf32>
    %60 = arith.cmpf oge, %57, %59 : vector<16x128xf32>
    %61 = vector.broadcast %58 : f32 to vector<16x128xf32>
    %62 = arith.mulf %61, %57 : vector<16x128xf32>
    %63 = arith.select %60, %57, %62 : vector<16x128xi1>, vector<16x128xf32>
    %64 = arith.addf %7, %63 : vector<16x128xf32>
    %c0_56 = arith.constant 0 : index
    %c0_57 = arith.constant 0 : index
    %c0_58 = arith.constant 0 : index
    %65 = vector.load %arg9[%c0_56, %c0_57, %c0_58] : memref<1x16x128xf32, #tpu.memory_space<vmem>>, vector<1x16x128xf32>
    %66 = vector.shape_cast %65 : vector<1x16x128xf32> to vector<16x128xf32>
    %67 = vector.shape_cast %64 : vector<16x128xf32> to vector<1x16x128xf32>
    tpu.vector_store %arg9[%c0_56, %c0_57, %c0_58], %67 {strides = array<i32>} : memref<1x16x128xf32, #tpu.memory_space<vmem>>, vector<1x16x128xf32>,
    return
  }
  func.func @transform_0(%arg0: i32, %arg1: memref<2xf32, #tpu.memory_space<smem>>) -> (i32, i32, i32) {
    %c0_i32 = arith.constant 0 : i32
    %c0_i32_0 = arith.constant 0 : i32
    %c0_i32_1 = arith.constant 0 : i32
    return %arg0, %c0_i32, %c0_i32_0 : i32, i32, i32
  }
  func.func @transform_1(%arg0: i32, %arg1: memref<2xf32, #tpu.memory_space<smem>>) -> (i32, i32, i32) {
    %c0_i32 = arith.constant 0 : i32
    %c0_i32_0 = arith.constant 0 : i32
    %c0_i32_1 = arith.constant 0 : i32
    %c0_i32_2 = arith.constant 0 : i32
    return %c0_i32, %c0_i32_0, %c0_i32_1 : i32, i32, i32
  }
  func.func @transform_2(%arg0: i32, %arg1: memref<2xf32, #tpu.memory_space<smem>>) -> (i32, i32) {
    %c0_i32 = arith.constant 0 : i32
    %c0_i32_0 = arith.constant 0 : i32
    %c0_i32_1 = arith.constant 0 : i32
    return %c0_i32, %c0_i32_0 : i32, i32
  }
  func.func @transform_3(%arg0: i32, %arg1: memref<2xf32, #tpu.memory_space<smem>>) -> (i32, i32, i32) {
    %c0_i32 = arith.constant 0 : i32
    %c0_i32_0 = arith.constant 0 : i32
    %c0_i32_1 = arith.constant 0 : i32
    %c0_i32_2 = arith.constant 0 : i32
    return %c0_i32, %c0_i32_0, %c0_i32_1 : i32, i32, i32
  }
  func.func @transform_4(%arg0: i32, %arg1: memref<2xf32, #tpu.memory_space<smem>>) -> (i32, i32) {
    %c0_i32 = arith.constant 0 : i32
    %c0_i32_0 = arith.constant 0 : i32
    %c0_i32_1 = arith.constant 0 : i32
    return %c0_i32, %c0_i32_0 : i32, i32
  }
  func.func @transform_5(%arg0: i32, %arg1: memref<2xf32, #tpu.memory_space<smem>>) -> (i32, i32) {
    %c0_i32 = arith.constant 0 : i32
    %c0_i32_0 = arith.constant 0 : i32
    %c0_i32_1 = arith.constant 0 : i32
    return %c0_i32, %c0_i32_0 : i32, i32
  }
  func.func @transform_6(%arg0: i32, %arg1: memref<2xf32, #tpu.memory_space<smem>>) -> (i32, i32) {
    %c0_i32 = arith.constant 0 : i32
    %c0_i32_0 = arith.constant 0 : i32
    %c0_i32_1 = arith.constant 0 : i32
    return %c0_i32, %c0_i32_0 : i32, i32
  }
  func.func @transform_7(%arg0: i32, %arg1: memref<2xf32, #tpu.memory_space<smem>>) -> (i32, i32, i32) {
    %c0_i32 = arith.constant 0 : i32
    %c0_i32_0 = arith.constant 0 : i32
    %c0_i32_1 = arith.constant 0 : i32
    return %arg0, %c0_i32, %c0_i32_0 : i32, i32, i32
  }
}

</mosaic_0001>

<llo_original>
// kernel: temporal_conv_block_forward.1
$region0: #{temporal_conv_block_forward.1}
  #allocation0 [shape = 'u32[]', space=smem, size = 0x4, offset = 0x4, fixed_abs, tag = 'smem constant byte address 0x4 - core index']
  #allocation1 [shape = 'u32[144,128]{1,0:T(1,128)}', space=vmem, size = 0x12000, scoped, tag = 'internal scratch']
  #allocation2 [shape = 'bf16[20,128]{1,0:T(8,128)(2,1)}', space=vmem, size = 0x1800, scoped, tag = 'scratch operand']
  #allocation3 [shape = 's32[1]{0}', space=sflag, size = 0x4, scoped, tag = 'scoped memory for temporal_conv_block_forward.1']
  #allocation4 [shape = 'u8[512]{0}', space=smem, size = 0x200, scoped, tag = 'prefetched SMEM operand 0']
  %s0 = inlined_call_operand.vmem [shape: f32[2], index: 0, kind: input, shape index: {}]
  %s1 = inlined_call_operand.vmem [shape: f32[2,16,128], index: 1, kind: input, shape index: {}]
  %s2 = inlined_call_operand.hbm [shape: bf16[3,128,128], index: 2, kind: input, shape index: {}]
  %s3 = inlined_call_operand.vmem [shape: f32[1,128], index: 3, kind: input, shape index: {}]
  %s4 = inlined_call_operand.hbm [shape: bf16[3,128,128], index: 4, kind: input, shape index: {}]
  %s5 = inlined_call_operand.vmem [shape: f32[1,128], index: 5, kind: input, shape index: {}]
  %s6 = inlined_call_operand.vmem [shape: bf16[128,128], index: 6, kind: input, shape index: {}]
  %s7 = inlined_call_operand.vmem [shape: f32[1,128], index: 7, kind: input, shape index: {}]
  %s8 = inlined_call_operand.vmem [shape: f32[2,16,128], index: 8, kind: output, shape index: {}]
  %s9 = sld [smem:[#allocation0]]
  $region69: #{temporal_conv_block_forward.1} parent=0
    _
  %s11 = ssub.s32 1, %s9
  %s12 = scalar_select 0, %s11, %s9
  %s13 = sshll.u32 %s0, 4
  %s14 = int_to_ptr.vmem [resolvable:$true] %s13
  %16 = dma.vmem_to_smem %s14, 16, [#allocation4], [#allocation3]
  %17 = dma.done [#allocation3], 16
  %18 = sfence
  $region1: #{temporal_conv_block_forward.1} parent=0
    #allocation5 [shape = 'u8[98304]{0}', space=vmem, size = 0x18000, scoped, tag = 'input window, operand 2, single buffered']
    #allocation6 [shape = 's32[2]{0}', space=sflag, size = 0x8, scoped, tag = 'scoped memory for temporal_conv_block_forward.1']
    #allocation7 [shape = 'u8[98304]{0}', space=vmem, size = 0x18000, scoped, tag = 'input window, operand 4, single buffered']
    #allocation8 [shape = 's32[1]{0}', space=sflag, size = 0x4, scoped, tag = 'scoped memory for temporal_conv_block_forward.1']
    %19 = vsyncpa [#allocation6], 0
    %20 = vsyncpa [#allocation8], 0
    loop: start=0, step=1, limit=4
    $region2: #{temporal_conv_block_forward.1} parent=1 // loop_pre_header
      _
    $region3: #{temporal_conv_block_forward.1} parent=1 // loop_header
      %s22 = sphi 0, %s26
      %p23 = scmp.ge.s32.totalorder %s22, 4
      %s32 = sphi 0, %s34
      %s35 = sphi 0, %s32
      %s36 = sphi 0, %s35
      %s52 = sphi 0, %s36
      %s56 = sphi 0, %s56
      %s58 = sphi 0, %s56
      %s59 = sphi 0, %s58
      %s73 = sphi 0, %s59
      %s77 = sphi 0, %s77
      %s79 = sphi 0, %s77
      %s80 = sphi 0, %s79
      %s94 = sphi 0, %s80
      %s98 = sphi 0, %s98
      %s100 = sphi 0, %s98
      %s101 = sphi 0, %s100
      %s115 = sphi 0, %s101
      %s119 = sphi 0, %s119
      %s121 = sphi 0, %s119
      %s122 = sphi 0, %s121
      %s136 = sphi 0, %s122
      %s140 = sphi 0, %s140
      %s142 = sphi 0, %s140
      %s143 = sphi 0, %s142
      %s157 = sphi 0, %s143
      %s161 = sphi 0, %s161
      %s163 = sphi 0, %s161
      %s164 = sphi 0, %s163
      %s178 = sphi 0, %s164
      %s184 = sphi 0, %s186
      %s187 = sphi 0, %s184
      %s188 = sphi 0, %s187
      %s204 = sphi 0, %s188
    $region4: #{temporal_conv_block_forward.1} parent=1 // loop_header_branch
      %25 = sbr.rel (%p23) target = $region8
    $region5: #{temporal_conv_block_forward.1} parent=1 // loop_body
      %s27 = ssub.s32 %s22, 1
      %s28 = ssub.s32 %s22, 2
      %s29 = sadd.s32 %s22, 1
      %s30 = ssub.s32 %s22, %s29
      %p31 = scmp.eq.s32.totalorder %s30, 0
      %s33 = sadd.s32 %s32, 1
      %s34 = scalar_select %p31, %s32, %s33
      %p37 = pneg %p31
      %p38 = scmp.eq.s32.totalorder %s22, 1
      %p39 = por %p37, %p38
      %p40 = scmp.ne.s32.totalorder %s32, %s35
      %p41 = scmp.eq.s32.totalorder %s22, 0
      %p42 = por %p40, %p41
      %p43 = scmp.ne.s32.totalorder %s32, %s35
      %p44 = scmp.eq.s32.totalorder %s27, 1
      %p45 = por %p43, %p44
      %p46 = scmp.ne.s32.totalorder %s35, %s36
      %p47 = scmp.eq.s32.totalorder %s27, 0
      %p48 = por %p46, %p47
      %p49 = scmp.ne.s32.totalorder %s35, %s36
      %p50 = scmp.eq.s32.totalorder %s28, 1
      %p51 = por %p49, %p50
      %p53 = scmp.ne.s32.totalorder %s36, %s52
      %p54 = scmp.eq.s32.totalorder %s28, 0
      %p55 = por %p53, %p54
      %s57 = sadd.s32 %s56, 1
      %p60 = scmp.eq.s32.totalorder %s22, 1
      %p61 = scmp.ne.s32.totalorder %s56, %s58
      %p62 = scmp.eq.s32.totalorder %s22, 0
      %p63 = por %p61, %p62
      %p64 = scmp.ne.s32.totalorder %s56, %s58
      %p65 = scmp.eq.s32.totalorder %s27, 1
      %p66 = por %p64, %p65
      %p67 = scmp.ne.s32.totalorder %s58, %s59
      %p68 = scmp.eq.s32.totalorder %s27, 0
      %p69 = por %p67, %p68
      %p70 = scmp.ne.s32.totalorder %s58, %s59
      %p71 = scmp.eq.s32.totalorder %s28, 1
      %p72 = por %p70, %p71
      %p74 = scmp.ne.s32.totalorder %s59, %s73
      %p75 = scmp.eq.s32.totalorder %s28, 0
      %p76 = por %p74, %p75
      %s78 = sadd.s32 %s77, 1
      %p81 = scmp.eq.s32.totalorder %s22, 1
      %p82 = scmp.ne.s32.totalorder %s77, %s79
      %p83 = scmp.eq.s32.totalorder %s22, 0
      %p84 = por %p82, %p83
      %p85 = scmp.ne.s32.totalorder %s77, %s79
      %p86 = scmp.eq.s32.totalorder %s27, 1
      %p87 = por %p85, %p86
      %p88 = scmp.ne.s32.totalorder %s79, %s80
      %p89 = scmp.eq.s32.totalorder %s27, 0
      %p90 = por %p88, %p89
      %p91 = scmp.ne.s32.totalorder %s79, %s80
      %p92 = scmp.eq.s32.totalorder %s28, 1
      %p93 = por %p91, %p92
      %p95 = scmp.ne.s32.totalorder %s80, %s94
      %p96 = scmp.eq.s32.totalorder %s28, 0
      %p97 = por %p95, %p96
      %s99 = sadd.s32 %s98, 1
      %p102 = scmp.eq.s32.totalorder %s22, 1
      %p103 = scmp.ne.s32.totalorder %s98, %s100
      %p104 = scmp.eq.s32.totalorder %s22, 0
      %p105 = por %p103, %p104
      %p106 = scmp.ne.s32.totalorder %s98, %s100
      %p107 = scmp.eq.s32.totalorder %s27, 1
      %p108 = por %p106, %p107
      %p109 = scmp.ne.s32.totalorder %s100, %s101
      %p110 = scmp.eq.s32.totalorder %s27, 0
      %p111 = por %p109, %p110
      %p112 = scmp.ne.s32.totalorder %s100, %s101
      %p113 = scmp.eq.s32.totalorder %s28, 1
      %p114 = por %p112, %p113
      %p116 = scmp.ne.s32.totalorder %s101, %s115
      %p117 = scmp.eq.s32.totalorder %s28, 0
      %p118 = por %p116, %p117
      %s120 = sadd.s32 %s119, 1
      %p123 = scmp.eq.s32.totalorder %s22, 1
      %p124 = scmp.ne.s32.totalorder %s119, %s121
      %p125 = scmp.eq.s32.totalorder %s22, 0
      %p126 = por %p124, %p125
      %p127 = scmp.ne.s32.totalorder %s119, %s121
      %p128 = scmp.eq.s32.totalorder %s27, 1
      %p129 = por %p127, %p128
      %p130 = scmp.ne.s32.totalorder %s121, %s122
      %p131 = scmp.eq.s32.totalorder %s27, 0
      %p132 = por %p130, %p131
      %p133 = scmp.ne.s32.totalorder %s121, %s122
      %p134 = scmp.eq.s32.totalorder %s28, 1
      %p135 = por %p133, %p134
      %p137 = scmp.ne.s32.totalorder %s122, %s136
      %p138 = scmp.eq.s32.totalorder %s28, 0
      %p139 = por %p137, %p138
      %s141 = sadd.s32 %s140, 1
      %p144 = scmp.eq.s32.totalorder %s22, 1
      %p145 = scmp.ne.s32.totalorder %s140, %s142
      %p146 = scmp.eq.s32.totalorder %s22, 0
      %p147 = por %p145, %p146
      %p148 = scmp.ne.s32.totalorder %s140, %s142
      %p149 = scmp.eq.s32.totalorder %s27, 1
      %p150 = por %p148, %p149
      %p151 = scmp.ne.s32.totalorder %s142, %s143
      %p152 = scmp.eq.s32.totalorder %s27, 0
      %p153 = por %p151, %p152
      %p154 = scmp.ne.s32.totalorder %s142, %s143
      %p155 = scmp.eq.s32.totalorder %s28, 1
      %p156 = por %p154, %p155
      %p158 = scmp.ne.s32.totalorder %s143, %s157
      %p159 = scmp.eq.s32.totalorder %s28, 0
      %p160 = por %p158, %p159
      %s162 = sadd.s32 %s161, 1
      %p165 = scmp.eq.s32.totalorder %s22, 1
      %p166 = scmp.ne.s32.totalorder %s161, %s163
      %p167 = scmp.eq.s32.totalorder %s22, 0
      %p168 = por %p166, %p167
      %p169 = scmp.ne.s32.totalorder %s161, %s163
      %p170 = scmp.eq.s32.totalorder %s27, 1
      %p171 = por %p169, %p170
      %p172 = scmp.ne.s32.totalorder %s163, %s164
      %p173 = scmp.eq.s32.totalorder %s27, 0
      %p174 = por %p172, %p173
      %p175 = scmp.ne.s32.totalorder %s163, %s164
      %p176 = scmp.eq.s32.totalorder %s28, 1
      %p177 = por %p175, %p176
      %p179 = scmp.ne.s32.totalorder %s164, %s178
      %p180 = scmp.eq.s32.totalorder %s28, 0
      %p181 = por %p179, %p180
      %s182 = ssub.s32 %s22, %s29
      %p183 = scmp.eq.s32.totalorder %s182, 0
      %s185 = sadd.s32 %s184, 1
      %s186 = scalar_select %p183, %s184, %s185
      %p189 = pneg %p183
      %p190 = scmp.eq.s32.totalorder %s22, 1
      %p191 = por %p189, %p190
      %p192 = scmp.ne.s32.totalorder %s184, %s187
      %p193 = scmp.eq.s32.totalorder %s22, 0
      %p194 = por %p192, %p193
      %p195 = scmp.ne.s32.totalorder %s184, %s187
      %p196 = scmp.eq.s32.totalorder %s27, 1
      %p197 = por %p195, %p196
      %p198 = scmp.ne.s32.totalorder %s187, %s188
      %p199 = scmp.eq.s32.totalorder %s27, 0
      %p200 = por %p198, %p199
      %p201 = scmp.ne.s32.totalorder %s187, %s188
      %p202 = scmp.eq.s32.totalorder %s28, 1
      %p203 = por %p201, %p202
      %p205 = scmp.ne.s32.totalorder %s188, %s204
      %p206 = scmp.eq.s32.totalorder %s28, 0
      %p207 = por %p205, %p206
      %p208 = scmp.le.s32.totalorder 1, %s22
      %p209 = scmp.lt.s32.totalorder %s22, 3
      %p210 = pnand %p208, %p209
      %p211 = pneg %p210
      // Predicated region
      $region9: #{temporal_conv_block_forward.1} parent=5 // pred_check
        _
      $region10: #{temporal_conv_block_forward.1} parent=5 // pred_check_branch
        %213 = sbr.rel (%p210) target = $region12
      $region11: #{temporal_conv_block_forward.1} parent=5 // pred_region
        %s214 = ssub.s32 %s22, 1
        // Predicated region
        $region13: #{temporal_conv_block_forward.1} parent=11 // pred_check
          %p215 = pneg %p69
        $region14: #{temporal_conv_block_forward.1} parent=11 // pred_check_branch
          %217 = sbr.rel (%p215) target = $region16
        $region15: #{temporal_conv_block_forward.1} parent=11 // pred_region
          %s219 = ssub.s32 3072, 3072
          %220 = vsyncadd [#allocation6], %s219
          %s221 = sshll.u32 [#allocation5], 4
          %s222 = int_to_ptr.vmem [resolvable:$true] %s221
          %227 = dma.hbm_to_vmem [thread:$0]  %s2, 3072, %s222, [#allocation6], 64, 64, 4
        $region16: #{temporal_conv_block_forward.1} parent=11 // pred_fallthru
          _
        // Predicated region
        $region17: #{temporal_conv_block_forward.1} parent=11 // pred_check
          %p228 = pneg %p90
        $region18: #{temporal_conv_block_forward.1} parent=11 // pred_check_branch
          %230 = sbr.rel (%p228) target = $region20
        $region19: #{temporal_conv_block_forward.1} parent=11 // pred_region
          _
        $region20: #{temporal_conv_block_forward.1} parent=11 // pred_fallthru
          _
        // Predicated region
        $region21: #{temporal_conv_block_forward.1} parent=11 // pred_check
          %p231 = pneg %p111
        $region22: #{temporal_conv_block_forward.1} parent=11 // pred_check_branch
          %233 = sbr.rel (%p231) target = $region24
        $region23: #{temporal_conv_block_forward.1} parent=11 // pred_region
          %s235 = ssub.s32 3072, 3072
          %236 = vsyncadd [#allocation8], %s235
          %s237 = sshll.u32 [#allocation7], 4
          %s238 = int_to_ptr.vmem [resolvable:$true] %s237
          %243 = dma.hbm_to_vmem [thread:$0]  %s4, 3072, %s238, [#allocation8], 64, 64, 4
        $region24: #{temporal_conv_block_forward.1} parent=11 // pred_fallthru
          _
        // Predicated region
        $region25: #{temporal_conv_block_forward.1} parent=11 // pred_check
          %p244 = pneg %p132
        $region26: #{temporal_conv_block_forward.1} parent=11 // pred_check_branch
          %246 = sbr.rel (%p244) target = $region28
        $region27: #{temporal_conv_block_forward.1} parent=11 // pred_region
          _
        $region28: #{temporal_conv_block_forward.1} parent=11 // pred_fallthru
          _
        // Predicated region
        $region29: #{temporal_conv_block_forward.1} parent=11 // pred_check
          %p247 = pneg %p153
        $region30: #{temporal_conv_block_forward.1} parent=11 // pred_check_branch
          %249 = sbr.rel (%p247) target = $region32
        $region31: #{temporal_conv_block_forward.1} parent=11 // pred_region
          _
        $region32: #{temporal_conv_block_forward.1} parent=11 // pred_fallthru
          _
        // Predicated region
        $region33: #{temporal_conv_block_forward.1} parent=11 // pred_check
          %p250 = pneg %p174
        $region34: #{temporal_conv_block_forward.1} parent=11 // pred_check_branch
          %252 = sbr.rel (%p250) target = $region36
        $region35: #{temporal_conv_block_forward.1} parent=11 // pred_region
          _
        $region36: #{temporal_conv_block_forward.1} parent=11 // pred_fallthru
          _
      $region12: #{temporal_conv_block_forward.1} parent=5 // pred_fallthru
        _
      %p253 = scmp.lt.s32.totalorder %s22, 2
      // Predicated region
      $region37: #{temporal_conv_block_forward.1} parent=5 // pred_check
        %p254 = pneg %p253
      $region38: #{temporal_conv_block_forward.1} parent=5 // pred_check_branch
        %256 = sbr.rel (%p254) target = $region40
      $region39: #{temporal_conv_block_forward.1} parent=5 // pred_region
        // Predicated region
        $region41: #{temporal_conv_block_forward.1} parent=39 // pred_check
          %p257 = pneg %p42
        $region42: #{temporal_conv_block_forward.1} parent=39 // pred_check_branch
          %259 = sbr.rel (%p257) target = $region44
        $region43: #{temporal_conv_block_forward.1} parent=39 // pred_region
          %p260 = scmp.lt.s32.totalorder %s22, 1
          %s261 = scalar_select %p260, %s22, 1
          %s262 = smul.addr %s261, 2
          %s263 = smul.addr %s262, 8
          %s264 = scalar_lea.vmem %s1, %s263
        $region44: #{temporal_conv_block_forward.1} parent=39 // pred_fallthru
          _
      $region40: #{temporal_conv_block_forward.1} parent=5 // pred_fallthru
        _
      %p265 = scmp.le.s32.totalorder 1, %s22
      %p266 = scmp.lt.s32.totalorder %s22, 3
      %p267 = pnand %p265, %p266
      %p268 = pneg %p267
      // Predicated region
      $region45: #{temporal_conv_block_forward.1} parent=5 // pred_check
        _
      $region46: #{temporal_conv_block_forward.1} parent=5 // pred_check_branch
        %270 = sbr.rel (%p267) target = $region48
      $region47: #{temporal_conv_block_forward.1} parent=5 // pred_region
        %s271 = ssub.s32 %s22, 1
        // Predicated region
        $region49: #{temporal_conv_block_forward.1} parent=47 // pred_check
          %p272 = pneg %p69
        $region50: #{temporal_conv_block_forward.1} parent=47 // pred_check_branch
          %274 = sbr.rel (%p272) target = $region52
        $region51: #{temporal_conv_block_forward.1} parent=47 // pred_region
          %275 = dma.done [#allocation6], 3072
        $region52: #{temporal_conv_block_forward.1} parent=47 // pred_fallthru
          _
        // Predicated region
        $region53: #{temporal_conv_block_forward.1} parent=47 // pred_check
          %p276 = pneg %p111
        $region54: #{temporal_conv_block_forward.1} parent=47 // pred_check_branch
          %278 = sbr.rel (%p276) target = $region56
        $region55: #{temporal_conv_block_forward.1} parent=47 // pred_region
          %279 = dma.done [#allocation8], 3072
        $region56: #{temporal_conv_block_forward.1} parent=47 // pred_fallthru
          _
        %p280 = scmp.lt.s32.totalorder %s27, 1
        %s281 = scalar_select %p280, %s27, 1
        %s282 = smul.addr %s281, 2
        %s283 = smul.addr %s282, 8
        %s284 = scalar_lea.vmem %s1, %s283
        %p285 = pneg %p48
        %p286 = pneg %p45
        %p287 = pneg %p69
        %p288 = pneg %p66
        %p289 = pneg %p90
        %p290 = pneg %p87
        %p291 = pneg %p111
        %p292 = pneg %p108
        %p293 = pneg %p132
        %p294 = pneg %p129
        %p295 = pneg %p153
        %p296 = pneg %p150
        %p297 = pneg %p174
        %p298 = pneg %p171
        %p299 = pneg %p200
        %p300 = pneg %p197
        %p301 = scmp.lt.s32.totalorder %s27, 1
        %s302 = scalar_select %p301, %s27, 1
        %s303 = smul.addr %s302, 2
        %s304 = smul.addr %s303, 8
        %s305 = scalar_lea.vmem %s8, %s304
        %p306 = scmp.lt.s32.totalorder %s27, 1
        %s307 = scalar_select %p306, %s27, 1
        %s308 = smul.addr %s307, 2
        %s309 = smul.addr %s308, 8
        %s310 = scalar_lea.vmem %s1, %s309
        %p311 = scmp.lt.s32.totalorder %s27, 1
        %s312 = scalar_select %p311, %s27, 1
        %s313 = smul.addr %s312, 2
        %s314 = smul.addr %s313, 8
        %s315 = scalar_lea.vmem %s8, %s314
        %v317 = vld [vmem:[%s310] sm:$0xff]
        %v318 = vld [vmem:[%s310 + $0x8] sm:$0xff]
        %v319 = vpack.c.bf16 %v318, %v317
        %v320 = vld [vmem:[%s6] sm:$0xf]
        %v321 = vld [vmem:[%s6 + $0x4] sm:$0xf]
        %v322 = vld [vmem:[%s6 + $0x8] sm:$0xf]
        %v323 = vld [vmem:[%s6 + $0xc] sm:$0xf]
        %v324 = vld [vmem:[%s6 + $0x10] sm:$0xf]
        %v325 = vld [vmem:[%s6 + $0x14] sm:$0xf]
        %v326 = vld [vmem:[%s6 + $0x18] sm:$0xf]
        %v327 = vld [vmem:[%s6 + $0x1c] sm:$0xf]
        %v328 = vld [vmem:[%s6 + $0x20] sm:$0xf]
        %v329 = vld [vmem:[%s6 + $0x24] sm:$0xf]
        %v330 = vld [vmem:[%s6 + $0x28] sm:$0xf]
        %v331 = vld [vmem:[%s6 + $0x2c] sm:$0xf]
        %v332 = vld [vmem:[%s6 + $0x30] sm:$0xf]
        %v333 = vld [vmem:[%s6 + $0x34] sm:$0xf]
        %v334 = vld [vmem:[%s6 + $0x38] sm:$0xf]
        %v335 = vld [vmem:[%s6 + $0x3c] sm:$0xf]
        %v336 = vld [vmem:[%s7] sm:$0x1]
        %v338 = vlaneseq
        %v339 = vshrl.u32 %v338, 7
        %v340 = vsub.s32 0, %v339
        %v341 = vrot.slane %v336, %v340
        %v359 = vunpack.c.l.b16 %v320
        %v360 = vunpack.c.l.b16 %v321
        %v361 = vunpack.c.l.b16 %v322
        %v362 = vunpack.c.l.b16 %v323
        %v363 = vunpack.c.l.b16 %v324
        %v364 = vunpack.c.l.b16 %v325
        %v365 = vunpack.c.l.b16 %v326
        %v366 = vunpack.c.l.b16 %v327
        %v367 = vunpack.c.l.b16 %v328
        %v368 = vunpack.c.l.b16 %v329
        %v369 = vunpack.c.l.b16 %v330
        %v370 = vunpack.c.l.b16 %v331
        %v371 = vunpack.c.l.b16 %v332
        %v372 = vunpack.c.l.b16 %v333
        %v373 = vunpack.c.l.b16 %v334
        %v374 = vunpack.c.l.b16 %v335
        %v375 = vpack.c.b16 %v360, %v359
        %v376 = vpack.c.b16 %v362, %v361
        %v377 = vpack.c.b16 %v364, %v363
        %v378 = vpack.c.b16 %v366, %v365
        %v379 = vpack.c.b16 %v368, %v367
        %v380 = vpack.c.b16 %v370, %v369
        %v381 = vpack.c.b16 %v372, %v371
        %v382 = vpack.c.b16 %v374, %v373
        %391 = vmatprep.subr.bf16.mxu0 0
        %392 = vmatpush1.bf16.msra.mxu0 %v375
        %393 = vmatprep.subr.bf16.mxu0 0
        %394 = vmatpush1.bf16.msra.mxu0 %v376
        %395 = vmatprep.subr.bf16.mxu0 0
        %396 = vmatpush1.bf16.msra.mxu0 %v377
        %397 = vmatprep.subr.bf16.mxu0 0
        %398 = vmatpush1.bf16.msra.mxu0 %v378
        %399 = vmatprep.subr.bf16.mxu0 0
        %400 = vmatpush1.bf16.msra.mxu0 %v379
        %401 = vmatprep.subr.bf16.mxu0 0
        %402 = vmatpush1.bf16.msra.mxu0 %v380
        %403 = vmatprep.subr.bf16.mxu0 0
        %404 = vmatpush1.bf16.msra.mxu0 %v381
        %405 = vmatprep.subr.bf16.mxu0 0
        %406 = vmatpush1.bf16.msra.mxu0 %v382
        %407 = vmatprep.subr.bf16.mxu0 0
        %408 = vmatpush1.bf16.msra.mxu0 0
        %409 = vmatprep.subr.bf16.mxu0 0
        %410 = vmatpush1.bf16.msra.mxu0 0
        %411 = vmatprep.subr.bf16.mxu0 0
        %412 = vmatpush1.bf16.msra.mxu0 0
        %413 = vmatprep.subr.bf16.mxu0 0
        %414 = vmatpush1.bf16.msra.mxu0 0
        %415 = vmatprep.subr.bf16.mxu0 0
        %416 = vmatpush1.bf16.msra.mxu0 0
        %417 = vmatprep.subr.bf16.mxu0 0
        %418 = vmatpush1.bf16.msra.mxu0 0
        %419 = vmatprep.subr.bf16.mxu0 0
        %420 = vmatpush1.bf16.msra.mxu0 0
        %421 = vmatprep.subr.bf16.mxu0 0
        %422 = vmatpush1.bf16.msra.mxu0 0
        %423 = vmatprep.mubr.bf16.mxu0 0
        %424 = vmatmul.mubr.bf16.gmra.mrb[0].mxu0 %v319
        %v425 = vpop.f32.mrb[0].mxu0
        %v426 = vadd.f32 %v341, %v425
        %v427 = vpop.f32.mrb[0].mxu0
        %v428 = vpop.f32.mrb[0].mxu0
        %v429 = vadd.f32 %v341, %v428
        %v430 = vpop.f32.mrb[0].mxu0
        %431 = vdwg.mxu0
        %432 = vst [vmem:[#allocation2] sm:$0x3] 0
        %v434 = vunpack.c.l.b16 %v319
        %v435 = vunpack.c.h.b16 %v319
        %v436 = vpack.c.b16 %v434, %v434
        %v437 = vpack.c.b16 %v435, %v435
        %vm438 = vcmask 1041408
        %vm439 = vcmask 1045508
        %vm440 = vmor %vm438, %vm439
        %v441 = vrot.slane %v436, 6
        %v442 = vrot.slane %v441, 4
        %v443 = vrot.slane %v437, 6
        %v444 = vsel %vm440, %v442, %v443
        %v445 = vrot.slane %v443, 4
        %449 = vst [vmem:[#allocation2] sm:$0xc] %v441
        %450 = vst [vmem:[#allocation2 + $0x4] sm:$0xf] %v444
        %451 = vst [vmem:[#allocation2 + $0x8] sm:$0x3] %v445
        %v452 = vld [vmem:[#allocation2] sm:$0xf]
        %v453 = vld [vmem:[#allocation2 + $0x4] sm:$0xf]
        %v454 = vld [vmem:[#allocation5] sm:$0xf]
        %v455 = vld [vmem:[#allocation5 + $0x4] sm:$0xf]
        %v456 = vld [vmem:[#allocation5 + $0x8] sm:$0xf]
        %v457 = vld [vmem:[#allocation5 + $0xc] sm:$0xf]
        %v458 = vld [vmem:[#allocation5 + $0x10] sm:$0xf]
        %v459 = vld [vmem:[#allocation5 + $0x14] sm:$0xf]
        %v460 = vld [vmem:[#allocation5 + $0x18] sm:$0xf]
        %v461 = vld [vmem:[#allocation5 + $0x1c] sm:$0xf]
        %v462 = vld [vmem:[#allocation5 + $0x20] sm:$0xf]
        %v463 = vld [vmem:[#allocation5 + $0x24] sm:$0xf]
        %v464 = vld [vmem:[#allocation5 + $0x28] sm:$0xf]
        %v465 = vld [vmem:[#allocation5 + $0x2c] sm:$0xf]
        %v466 = vld [vmem:[#allocation5 + $0x30] sm:$0xf]
        %v467 = vld [vmem:[#allocation5 + $0x34] sm:$0xf]
        %v468 = vld [vmem:[#allocation5 + $0x38] sm:$0xf]
        %v469 = vld [vmem:[#allocation5 + $0x3c] sm:$0xf]
        %v470 = vld [vmem:[#allocation2] sm:$0xe]
        %v471 = vld [vmem:[#allocation2 + $0x8] sm:$0x1]
        %s472 = scalar_lea.vmem [#allocation5], 64
        %v473 = vld [vmem:[%s472] sm:$0xf]
        %v474 = vld [vmem:[%s472 + $0x4] sm:$0xf]
        %v475 = vld [vmem:[%s472 + $0x8] sm:$0xf]
        %v476 = vld [vmem:[%s472 + $0xc] sm:$0xf]
        %v477 = vld [vmem:[%s472 + $0x10] sm:$0xf]
        %v478 = vld [vmem:[%s472 + $0x14] sm:$0xf]
        %v479 = vld [vmem:[%s472 + $0x18] sm:$0xf]
        %v480 = vld [vmem:[%s472 + $0x1c] sm:$0xf]
        %v481 = vld [vmem:[%s472 + $0x20] sm:$0xf]
        %v482 = vld [vmem:[%s472 + $0x24] sm:$0xf]
        %v483 = vld [vmem:[%s472 + $0x28] sm:$0xf]
        %v484 = vld [vmem:[%s472 + $0x2c] sm:$0xf]
        %v485 = vld [vmem:[%s472 + $0x30] sm:$0xf]
        %v486 = vld [vmem:[%s472 + $0x34] sm:$0xf]
        %v487 = vld [vmem:[%s472 + $0x38] sm:$0xf]
        %v488 = vld [vmem:[%s472 + $0x3c] sm:$0xf]
        %v492 = vunpack.c.l.b16 %v470
        %v493 = vunpack.c.l.b16 %v453
        %v494 = vunpack.c.l.b16 %v471
        %v495 = vpack.c.b16 %v493, %v492
        %v496 = vpack.c.b16 %v494, %v494
        %vm497 = vcmask 1046528
        %v498 = vrot.slane %v495, 1
        %v499 = vrot.slane %v496, 1
        %v500 = vsel %vm497, %v498, %v499
        %v518 = vunpack.c.l.b16 %v473
        %v519 = vunpack.c.l.b16 %v474
        %v520 = vunpack.c.l.b16 %v475
        %v521 = vunpack.c.l.b16 %v476
        %v522 = vunpack.c.l.b16 %v477
        %v523 = vunpack.c.l.b16 %v478
        %v524 = vunpack.c.l.b16 %v479
        %v525 = vunpack.c.l.b16 %v480
        %v526 = vunpack.c.l.b16 %v481
        %v527 = vunpack.c.l.b16 %v482
        %v528 = vunpack.c.l.b16 %v483
        %v529 = vunpack.c.l.b16 %v484
        %v530 = vunpack.c.l.b16 %v485
        %v531 = vunpack.c.l.b16 %v486
        %v532 = vunpack.c.l.b16 %v487
        %v533 = vunpack.c.l.b16 %v488
        %v534 = vpack.c.b16 %v519, %v518
        %v535 = vpack.c.b16 %v521, %v520
        %v536 = vpack.c.b16 %v523, %v522
        %v537 = vpack.c.b16 %v525, %v524
        %v538 = vpack.c.b16 %v527, %v526
        %v539 = vpack.c.b16 %v529, %v528
        %v540 = vpack.c.b16 %v531, %v530
        %v541 = vpack.c.b16 %v533, %v532
        %550 = vmatprep.subr.bf16.mxu0 0
        %551 = vmatpush1.bf16.msra.mxu0 %v534
        %552 = vmatprep.subr.bf16.mxu0 0
        %553 = vmatpush1.bf16.msra.mxu0 %v535
        %554 = vmatprep.subr.bf16.mxu0 0
        %555 = vmatpush1.bf16.msra.mxu0 %v536
        %556 = vmatprep.subr.bf16.mxu0 0
        %557 = vmatpush1.bf16.msra.mxu0 %v537
        %558 = vmatprep.subr.bf16.mxu0 0
        %559 = vmatpush1.bf16.msra.mxu0 %v538
        %560 = vmatprep.subr.bf16.mxu0 0
        %561 = vmatpush1.bf16.msra.mxu0 %v539
        %562 = vmatprep.subr.bf16.mxu0 0
        %563 = vmatpush1.bf16.msra.mxu0 %v540
        %564 = vmatprep.subr.bf16.mxu0 0
        %565 = vmatpush1.bf16.msra.mxu0 %v541
        %566 = vmatprep.subr.bf16.mxu0 0
        %567 = vmatpush1.bf16.msra.mxu0 0
        %568 = vmatprep.subr.bf16.mxu0 0
        %569 = vmatpush1.bf16.msra.mxu0 0
        %570 = vmatprep.subr.bf16.mxu0 0
        %571 = vmatpush1.bf16.msra.mxu0 0
        %572 = vmatprep.subr.bf16.mxu0 0
        %573 = vmatpush1.bf16.msra.mxu0 0
        %574 = vmatprep.subr.bf16.mxu0 0
        %575 = vmatpush1.bf16.msra.mxu0 0
        %576 = vmatprep.subr.bf16.mxu0 0
        %577 = vmatpush1.bf16.msra.mxu0 0
        %578 = vmatprep.subr.bf16.mxu0 0
        %579 = vmatpush1.bf16.msra.mxu0 0
        %580 = vmatprep.subr.bf16.mxu0 0
        %581 = vmatpush1.bf16.msra.mxu0 0
        %582 = vmatprep.mubr.bf16.mxu0 0
        %583 = vmatmul.mubr.bf16.gmra.mrb[0].mxu0 %v500
        %v584 = vpop.f32.mrb[0].mxu0
        %v585 = vadd.f32 0.0, %v584
        %v586 = vpop.f32.mrb[0].mxu0
        %v587 = vpop.f32.mrb[0].mxu0
        %v588 = vadd.f32 0.0, %v587
        %v589 = vpop.f32.mrb[0].mxu0
        %590 = vdwg.mxu0
        %v592 = vunpack.c.l.b16 %v452
        %v593 = vpack.c.b16 %v493, %v592
        %v611 = vunpack.c.l.b16 %v454
        %v612 = vunpack.c.l.b16 %v455
        %v613 = vunpack.c.l.b16 %v456
        %v614 = vunpack.c.l.b16 %v457
        %v615 = vunpack.c.l.b16 %v458
        %v616 = vunpack.c.l.b16 %v459
        %v617 = vunpack.c.l.b16 %v460
        %v618 = vunpack.c.l.b16 %v461
        %v619 = vunpack.c.l.b16 %v462
        %v620 = vunpack.c.l.b16 %v463
        %v621 = vunpack.c.l.b16 %v464
        %v622 = vunpack.c.l.b16 %v465
        %v623 = vunpack.c.l.b16 %v466
        %v624 = vunpack.c.l.b16 %v467
        %v625 = vunpack.c.l.b16 %v468
        %v626 = vunpack.c.l.b16 %v469
        %v627 = vpack.c.b16 %v612, %v611
        %v628 = vpack.c.b16 %v614, %v613
        %v629 = vpack.c.b16 %v616, %v615
        %v630 = vpack.c.b16 %v618, %v617
        %v631 = vpack.c.b16 %v620, %v619
        %v632 = vpack.c.b16 %v622, %v621
        %v633 = vpack.c.b16 %v624, %v623
        %v634 = vpack.c.b16 %v626, %v625
        %643 = vmatprep.subr.bf16.mxu0 0
        %644 = vmatpush1.bf16.msra.mxu0 %v627
        %645 = vmatprep.subr.bf16.mxu0 0
        %646 = vmatpush1.bf16.msra.mxu0 %v628
        %647 = vmatprep.subr.bf16.mxu0 0
        %648 = vmatpush1.bf16.msra.mxu0 %v629
        %649 = vmatprep.subr.bf16.mxu0 0
        %650 = vmatpush1.bf16.msra.mxu0 %v630
        %651 = vmatprep.subr.bf16.mxu0 0
        %652 = vmatpush1.bf16.msra.mxu0 %v631
        %653 = vmatprep.subr.bf16.mxu0 0
        %654 = vmatpush1.bf16.msra.mxu0 %v632
        %655 = vmatprep.subr.bf16.mxu0 0
        %656 = vmatpush1.bf16.msra.mxu0 %v633
        %657 = vmatprep.subr.bf16.mxu0 0
        %658 = vmatpush1.bf16.msra.mxu0 %v634
        %659 = vmatprep.subr.bf16.mxu0 0
        %660 = vmatpush1.bf16.msra.mxu0 0
        %661 = vmatprep.subr.bf16.mxu0 0
        %662 = vmatpush1.bf16.msra.mxu0 0
        %663 = vmatprep.subr.bf16.mxu0 0
        %664 = vmatpush1.bf16.msra.mxu0 0
        %665 = vmatprep.subr.bf16.mxu0 0
        %666 = vmatpush1.bf16.msra.mxu0 0
        %667 = vmatprep.subr.bf16.mxu0 0
        %668 = vmatpush1.bf16.msra.mxu0 0
        %669 = vmatprep.subr.bf16.mxu0 0
        %670 = vmatpush1.bf16.msra.mxu0 0
        %671 = vmatprep.subr.bf16.mxu0 0
        %672 = vmatpush1.bf16.msra.mxu0 0
        %673 = vmatprep.subr.bf16.mxu0 0
        %674 = vmatpush1.bf16.msra.mxu0 0
        %675 = vmatprep.mubr.bf16.mxu0 0
        %676 = vmatmul.mubr.bf16.gmra.mrb[0].mxu0 %v593
        %v677 = vpop.f32.mrb[0].mxu0
        %v678 = vadd.f32 %v585, %v677
        %v679 = vpop.f32.mrb[0].mxu0
        %v680 = vpop.f32.mrb[0].mxu0
        %v681 = vadd.f32 %v588, %v680
        %v682 = vpop.f32.mrb[0].mxu0
        %683 = vdwg.mxu0
        %v684 = vld [vmem:[#allocation2] sm:$0xc]
        %v685 = vld [vmem:[#allocation2 + $0x8] sm:$0x3]
        %s686 = scalar_lea.vmem [#allocation5], 128
        %v687 = vld [vmem:[%s686] sm:$0xf]
        %v688 = vld [vmem:[%s686 + $0x4] sm:$0xf]
        %v689 = vld [vmem:[%s686 + $0x8] sm:$0xf]
        %v690 = vld [vmem:[%s686 + $0xc] sm:$0xf]
        %v691 = vld [vmem:[%s686 + $0x10] sm:$0xf]
        %v692 = vld [vmem:[%s686 + $0x14] sm:$0xf]
        %v693 = vld [vmem:[%s686 + $0x18] sm:$0xf]
        %v694 = vld [vmem:[%s686 + $0x1c] sm:$0xf]
        %v695 = vld [vmem:[%s686 + $0x20] sm:$0xf]
        %v696 = vld [vmem:[%s686 + $0x24] sm:$0xf]
        %v697 = vld [vmem:[%s686 + $0x28] sm:$0xf]
        %v698 = vld [vmem:[%s686 + $0x2c] sm:$0xf]
        %v699 = vld [vmem:[%s686 + $0x30] sm:$0xf]
        %v700 = vld [vmem:[%s686 + $0x34] sm:$0xf]
        %v701 = vld [vmem:[%s686 + $0x38] sm:$0xf]
        %v702 = vld [vmem:[%s686 + $0x3c] sm:$0xf]
        %v705 = vunpack.c.l.b16 %v684
        %v706 = vunpack.c.l.b16 %v685
        %v707 = vpack.c.b16 %v493, %v705
        %v708 = vpack.c.b16 %v706, %v706
        %vm709 = vcmask 1045504
        %v710 = vrot.slane %v707, 2
        %v711 = vrot.slane %v708, 2
        %v712 = vsel %vm709, %v710, %v711
        %v730 = vunpack.c.l.b16 %v687
        %v731 = vunpack.c.l.b16 %v688
        %v732 = vunpack.c.l.b16 %v689
        %v733 = vunpack.c.l.b16 %v690
        %v734 = vunpack.c.l.b16 %v691
        %v735 = vunpack.c.l.b16 %v692
        %v736 = vunpack.c.l.b16 %v693
        %v737 = vunpack.c.l.b16 %v694
        %v738 = vunpack.c.l.b16 %v695
        %v739 = vunpack.c.l.b16 %v696
        %v740 = vunpack.c.l.b16 %v697
        %v741 = vunpack.c.l.b16 %v698
        %v742 = vunpack.c.l.b16 %v699
        %v743 = vunpack.c.l.b16 %v700
        %v744 = vunpack.c.l.b16 %v701
        %v745 = vunpack.c.l.b16 %v702
        %v746 = vpack.c.b16 %v731, %v730
        %v747 = vpack.c.b16 %v733, %v732
        %v748 = vpack.c.b16 %v735, %v734
        %v749 = vpack.c.b16 %v737, %v736
        %v750 = vpack.c.b16 %v739, %v738
        %v751 = vpack.c.b16 %v741, %v740
        %v752 = vpack.c.b16 %v743, %v742
        %v753 = vpack.c.b16 %v745, %v744
        %762 = vmatprep.subr.bf16.mxu0 0
        %763 = vmatpush1.bf16.msra.mxu0 %v746
        %764 = vmatprep.subr.bf16.mxu0 0
        %765 = vmatpush1.bf16.msra.mxu0 %v747
        %766 = vmatprep.subr.bf16.mxu0 0
        %767 = vmatpush1.bf16.msra.mxu0 %v748
        %768 = vmatprep.subr.bf16.mxu0 0
        %769 = vmatpush1.bf16.msra.mxu0 %v749
        %770 = vmatprep.subr.bf16.mxu0 0
        %771 = vmatpush1.bf16.msra.mxu0 %v750
        %772 = vmatprep.subr.bf16.mxu0 0
        %773 = vmatpush1.bf16.msra.mxu0 %v751
        %774 = vmatprep.subr.bf16.mxu0 0
        %775 = vmatpush1.bf16.msra.mxu0 %v752
        %776 = vmatprep.subr.bf16.mxu0 0
        %777 = vmatpush1.bf16.msra.mxu0 %v753
        %778 = vmatprep.subr.bf16.mxu0 0
        %779 = vmatpush1.bf16.msra.mxu0 0
        %780 = vmatprep.subr.bf16.mxu0 0
        %781 = vmatpush1.bf16.msra.mxu0 0
        %782 = vmatprep.subr.bf16.mxu0 0
        %783 = vmatpush1.bf16.msra.mxu0 0
        %784 = vmatprep.subr.bf16.mxu0 0
        %785 = vmatpush1.bf16.msra.mxu0 0
        %786 = vmatprep.subr.bf16.mxu0 0
        %787 = vmatpush1.bf16.msra.mxu0 0
        %788 = vmatprep.subr.bf16.mxu0 0
        %789 = vmatpush1.bf16.msra.mxu0 0
        %790 = vmatprep.subr.bf16.mxu0 0
        %791 = vmatpush1.bf16.msra.mxu0 0
        %792 = vmatprep.subr.bf16.mxu0 0
        %793 = vmatpush1.bf16.msra.mxu0 0
        %794 = vmatprep.mubr.bf16.mxu0 0
        %795 = vmatmul.mubr.bf16.gmra.mrb[0].mxu0 %v712
        %v796 = vpop.f32.mrb[0].mxu0
        %v797 = vadd.f32 0.0, %v796
        %v798 = vpop.f32.mrb[0].mxu0
        %v799 = vpop.f32.mrb[0].mxu0
        %v800 = vadd.f32 0.0, %v799
        %v801 = vpop.f32.mrb[0].mxu0
        %802 = vdwg.mxu0
        %v803 = vadd.f32 %v678, %v797
        %v804 = vadd.f32 %v681, %v800
        %v805 = vld [vmem:[%s3] sm:$0x1]
        %v807 = vlaneseq
        %v808 = vshrl.u32 %v807, 7
        %v809 = vsub.s32 0, %v808
        %v810 = vrot.slane %v805, %v809
        %v812 = vadd.f32 %v803, %v810
        %v813 = vadd.f32 %v804, %v810
        %s814 = sld [smem:[#allocation4]]
        %vm815 = vcmp.ge.f32.partialorder %v812, 0.0
        %vm816 = vcmp.ge.f32.partialorder %v813, 0.0
        %v817 = vstv %s814
        %v818 = vmul.f32 %v817, %v812
        %v819 = vmul.f32 %v817, %v813
        %v820 = vsel %vm815, %v812, %v818
        %v821 = vsel %vm816, %v813, %v819
        %v822 = vpack.c.bf16 %v821, %v820
        %v824 = vunpack.c.l.b16 %v822
        %v825 = vunpack.c.h.b16 %v822
        %v826 = vpack.c.b16 %v824, %v824
        %v827 = vpack.c.b16 %v825, %v825
        %v828 = vrot.slane %v826, 6
        %v829 = vrot.slane %v828, 4
        %v830 = vrot.slane %v827, 6
        %v831 = vsel %vm440, %v829, %v830
        %v832 = vrot.slane %v830, 4
        %836 = vst [vmem:[#allocation2] sm:$0xc] %v828
        %837 = vst [vmem:[#allocation2 + $0x4] sm:$0xf] %v831
        %838 = vst [vmem:[#allocation2 + $0x8] sm:$0x3] %v832
        %v839 = vld [vmem:[#allocation2] sm:$0xf]
        %v840 = vld [vmem:[#allocation2 + $0x4] sm:$0xf]
        %v841 = vld [vmem:[#allocation7] sm:$0xf]
        %v842 = vld [vmem:[#allocation7 + $0x4] sm:$0xf]
        %v843 = vld [vmem:[#allocation7 + $0x8] sm:$0xf]
        %v844 = vld [vmem:[#allocation7 + $0xc] sm:$0xf]
        %v845 = vld [vmem:[#allocation7 + $0x10] sm:$0xf]
        %v846 = vld [vmem:[#allocation7 + $0x14] sm:$0xf]
        %v847 = vld [vmem:[#allocation7 + $0x18] sm:$0xf]
        %v848 = vld [vmem:[#allocation7 + $0x1c] sm:$0xf]
        %v849 = vld [vmem:[#allocation7 + $0x20] sm:$0xf]
        %v850 = vld [vmem:[#allocation7 + $0x24] sm:$0xf]
        %v851 = vld [vmem:[#allocation7 + $0x28] sm:$0xf]
        %v852 = vld [vmem:[#allocation7 + $0x2c] sm:$0xf]
        %v853 = vld [vmem:[#allocation7 + $0x30] sm:$0xf]
        %v854 = vld [vmem:[#allocation7 + $0x34] sm:$0xf]
        %v855 = vld [vmem:[#allocation7 + $0x38] sm:$0xf]
        %v856 = vld [vmem:[#allocation7 + $0x3c] sm:$0xf]
        %v857 = vld [vmem:[#allocation2] sm:$0xe]
        %v858 = vld [vmem:[#allocation2 + $0x8] sm:$0x1]
        %s859 = scalar_lea.vmem [#allocation7], 64
        %v860 = vld [vmem:[%s859] sm:$0xf]
        %v861 = vld [vmem:[%s859 + $0x4] sm:$0xf]
        %v862 = vld [vmem:[%s859 + $0x8] sm:$0xf]
        %v863 = vld [vmem:[%s859 + $0xc] sm:$0xf]
        %v864 = vld [vmem:[%s859 + $0x10] sm:$0xf]
        %v865 = vld [vmem:[%s859 + $0x14] sm:$0xf]
        %v866 = vld [vmem:[%s859 + $0x18] sm:$0xf]
        %v867 = vld [vmem:[%s859 + $0x1c] sm:$0xf]
        %v868 = vld [vmem:[%s859 + $0x20] sm:$0xf]
        %v869 = vld [vmem:[%s859 + $0x24] sm:$0xf]
        %v870 = vld [vmem:[%s859 + $0x28] sm:$0xf]
        %v871 = vld [vmem:[%s859 + $0x2c] sm:$0xf]
        %v872 = vld [vmem:[%s859 + $0x30] sm:$0xf]
        %v873 = vld [vmem:[%s859 + $0x34] sm:$0xf]
        %v874 = vld [vmem:[%s859 + $0x38] sm:$0xf]
        %v875 = vld [vmem:[%s859 + $0x3c] sm:$0xf]
        %v879 = vunpack.c.l.b16 %v857
        %v880 = vunpack.c.l.b16 %v840
        %v881 = vunpack.c.l.b16 %v858
        %v882 = vpack.c.b16 %v880, %v879
        %v883 = vpack.c.b16 %v881, %v881
        %v884 = vrot.slane %v882, 1
        %v885 = vrot.slane %v883, 1
        %v886 = vsel %vm497, %v884, %v885
        %v904 = vunpack.c.l.b16 %v860
        %v905 = vunpack.c.l.b16 %v861
        %v906 = vunpack.c.l.b16 %v862
        %v907 = vunpack.c.l.b16 %v863
        %v908 = vunpack.c.l.b16 %v864
        %v909 = vunpack.c.l.b16 %v865
        %v910 = vunpack.c.l.b16 %v866
        %v911 = vunpack.c.l.b16 %v867
        %v912 = vunpack.c.l.b16 %v868
        %v913 = vunpack.c.l.b16 %v869
        %v914 = vunpack.c.l.b16 %v870
        %v915 = vunpack.c.l.b16 %v871
        %v916 = vunpack.c.l.b16 %v872
        %v917 = vunpack.c.l.b16 %v873
        %v918 = vunpack.c.l.b16 %v874
        %v919 = vunpack.c.l.b16 %v875
        %v920 = vpack.c.b16 %v905, %v904
        %v921 = vpack.c.b16 %v907, %v906
        %v922 = vpack.c.b16 %v909, %v908
        %v923 = vpack.c.b16 %v911, %v910
        %v924 = vpack.c.b16 %v913, %v912
        %v925 = vpack.c.b16 %v915, %v914
        %v926 = vpack.c.b16 %v917, %v916
        %v927 = vpack.c.b16 %v919, %v918
        %936 = vmatprep.subr.bf16.mxu0 0
        %937 = vmatpush1.bf16.msra.mxu0 %v920
        %938 = vmatprep.subr.bf16.mxu0 0
        %939 = vmatpush1.bf16.msra.mxu0 %v921
        %940 = vmatprep.subr.bf16.mxu0 0
        %941 = vmatpush1.bf16.msra.mxu0 %v922
        %942 = vmatprep.subr.bf16.mxu0 0
        %943 = vmatpush1.bf16.msra.mxu0 %v923
        %944 = vmatprep.subr.bf16.mxu0 0
        %945 = vmatpush1.bf16.msra.mxu0 %v924
        %946 = vmatprep.subr.bf16.mxu0 0
        %947 = vmatpush1.bf16.msra.mxu0 %v925
        %948 = vmatprep.subr.bf16.mxu0 0
        %949 = vmatpush1.bf16.msra.mxu0 %v926
        %950 = vmatprep.subr.bf16.mxu0 0
        %951 = vmatpush1.bf16.msra.mxu0 %v927
        %952 = vmatprep.subr.bf16.mxu0 0
        %953 = vmatpush1.bf16.msra.mxu0 0
        %954 = vmatprep.subr.bf16.mxu0 0
        %955 = vmatpush1.bf16.msra.mxu0 0
        %956 = vmatprep.subr.bf16.mxu0 0
        %957 = vmatpush1.bf16.msra.mxu0 0
        %958 = vmatprep.subr.bf16.mxu0 0
        %959 = vmatpush1.bf16.msra.mxu0 0
        %960 = vmatprep.subr.bf16.mxu0 0
        %961 = vmatpush1.bf16.msra.mxu0 0
        %962 = vmatprep.subr.bf16.mxu0 0
        %963 = vmatpush1.bf16.msra.mxu0 0
        %964 = vmatprep.subr.bf16.mxu0 0
        %965 = vmatpush1.bf16.msra.mxu0 0
        %966 = vmatprep.subr.bf16.mxu0 0
        %967 = vmatpush1.bf16.msra.mxu0 0
        %968 = vmatprep.mubr.bf16.mxu0 0
        %969 = vmatmul.mubr.bf16.gmra.mrb[0].mxu0 %v886
        %v970 = vpop.f32.mrb[0].mxu0
        %v971 = vadd.f32 0.0, %v970
        %v972 = vpop.f32.mrb[0].mxu0
        %v973 = vpop.f32.mrb[0].mxu0
        %v974 = vadd.f32 0.0, %v973
        %v975 = vpop.f32.mrb[0].mxu0
        %976 = vdwg.mxu0
        %v978 = vunpack.c.l.b16 %v839
        %v979 = vpack.c.b16 %v880, %v978
        %v997 = vunpack.c.l.b16 %v841
        %v998 = vunpack.c.l.b16 %v842
        %v999 = vunpack.c.l.b16 %v843
        %v1000 = vunpack.c.l.b16 %v844
        %v1001 = vunpack.c.l.b16 %v845
        %v1002 = vunpack.c.l.b16 %v846
        %v1003 = vunpack.c.l.b16 %v847
        %v1004 = vunpack.c.l.b16 %v848
        %v1005 = vunpack.c.l.b16 %v849
        %v1006 = vunpack.c.l.b16 %v850
        %v1007 = vunpack.c.l.b16 %v851
        %v1008 = vunpack.c.l.b16 %v852
        %v1009 = vunpack.c.l.b16 %v853
        %v1010 = vunpack.c.l.b16 %v854
        %v1011 = vunpack.c.l.b16 %v855
        %v1012 = vunpack.c.l.b16 %v856
        %v1013 = vpack.c.b16 %v998, %v997
        %v1014 = vpack.c.b16 %v1000, %v999
        %v1015 = vpack.c.b16 %v1002, %v1001
        %v1016 = vpack.c.b16 %v1004, %v1003
        %v1017 = vpack.c.b16 %v1006, %v1005
        %v1018 = vpack.c.b16 %v1008, %v1007
        %v1019 = vpack.c.b16 %v1010, %v1009
        %v1020 = vpack.c.b16 %v1012, %v1011
        %1029 = vmatprep.subr.bf16.mxu0 0
        %1030 = vmatpush1.bf16.msra.mxu0 %v1013
        %1031 = vmatprep.subr.bf16.mxu0 0
        %1032 = vmatpush1.bf16.msra.mxu0 %v1014
        %1033 = vmatprep.subr.bf16.mxu0 0
        %1034 = vmatpush1.bf16.msra.mxu0 %v1015
        %1035 = vmatprep.subr.bf16.mxu0 0
        %1036 = vmatpush1.bf16.msra.mxu0 %v1016
        %1037 = vmatprep.subr.bf16.mxu0 0
        %1038 = vmatpush1.bf16.msra.mxu0 %v1017
        %1039 = vmatprep.subr.bf16.mxu0 0
        %1040 = vmatpush1.bf16.msra.mxu0 %v1018
        %1041 = vmatprep.subr.bf16.mxu0 0
        %1042 = vmatpush1.bf16.msra.mxu0 %v1019
        %1043 = vmatprep.subr.bf16.mxu0 0
        %1044 = vmatpush1.bf16.msra.mxu0 %v1020
        %1045 = vmatprep.subr.bf16.mxu0 0
        %1046 = vmatpush1.bf16.msra.mxu0 0
        %1047 = vmatprep.subr.bf16.mxu0 0
        %1048 = vmatpush1.bf16.msra.mxu0 0
        %1049 = vmatprep.subr.bf16.mxu0 0
        %1050 = vmatpush1.bf16.msra.mxu0 0
        %1051 = vmatprep.subr.bf16.mxu0 0
        %1052 = vmatpush1.bf16.msra.mxu0 0
        %1053 = vmatprep.subr.bf16.mxu0 0
        %1054 = vmatpush1.bf16.msra.mxu0 0
        %1055 = vmatprep.subr.bf16.mxu0 0
        %1056 = vmatpush1.bf16.msra.mxu0 0
        %1057 = vmatprep.subr.bf16.mxu0 0
        %1058 = vmatpush1.bf16.msra.mxu0 0
        %1059 = vmatprep.subr.bf16.mxu0 0
        %1060 = vmatpush1.bf16.msra.mxu0 0
        %1061 = vmatprep.mubr.bf16.mxu0 0
        %1062 = vmatmul.mubr.bf16.gmra.mrb[0].mxu0 %v979
        %v1063 = vpop.f32.mrb[0].mxu0
        %v1064 = vadd.f32 %v971, %v1063
        %v1065 = vpop.f32.mrb[0].mxu0
        %v1066 = vpop.f32.mrb[0].mxu0
        %v1067 = vadd.f32 %v974, %v1066
        %v1068 = vpop.f32.mrb[0].mxu0
        %1069 = vdwg.mxu0
        %v1070 = vld [vmem:[#allocation2] sm:$0xc]
        %v1071 = vld [vmem:[#allocation2 + $0x8] sm:$0x3]
        %s1072 = scalar_lea.vmem [#allocation7], 128
        %v1073 = vld [vmem:[%s1072] sm:$0xf]
        %v1074 = vld [vmem:[%s1072 + $0x4] sm:$0xf]
        %v1075 = vld [vmem:[%s1072 + $0x8] sm:$0xf]
        %v1076 = vld [vmem:[%s1072 + $0xc] sm:$0xf]
        %v1077 = vld [vmem:[%s1072 + $0x10] sm:$0xf]
        %v1078 = vld [vmem:[%s1072 + $0x14] sm:$0xf]
        %v1079 = vld [vmem:[%s1072 + $0x18] sm:$0xf]
        %v1080 = vld [vmem:[%s1072 + $0x1c] sm:$0xf]
        %v1081 = vld [vmem:[%s1072 + $0x20] sm:$0xf]
        %v1082 = vld [vmem:[%s1072 + $0x24] sm:$0xf]
        %v1083 = vld [vmem:[%s1072 + $0x28] sm:$0xf]
        %v1084 = vld [vmem:[%s1072 + $0x2c] sm:$0xf]
        %v1085 = vld [vmem:[%s1072 + $0x30] sm:$0xf]
        %v1086 = vld [vmem:[%s1072 + $0x34] sm:$0xf]
        %v1087 = vld [vmem:[%s1072 + $0x38] sm:$0xf]
        %v1088 = vld [vmem:[%s1072 + $0x3c] sm:$0xf]
        %v1091 = vunpack.c.l.b16 %v1070
        %v1092 = vunpack.c.l.b16 %v1071
        %v1093 = vpack.c.b16 %v880, %v1091
        %v1094 = vpack.c.b16 %v1092, %v1092
        %v1095 = vrot.slane %v1093, 2
        %v1096 = vrot.slane %v1094, 2
        %v1097 = vsel %vm709, %v1095, %v1096
        %v1115 = vunpack.c.l.b16 %v1073
        %v1116 = vunpack.c.l.b16 %v1074
        %v1117 = vunpack.c.l.b16 %v1075
        %v1118 = vunpack.c.l.b16 %v1076
        %v1119 = vunpack.c.l.b16 %v1077
        %v1120 = vunpack.c.l.b16 %v1078
        %v1121 = vunpack.c.l.b16 %v1079
        %v1122 = vunpack.c.l.b16 %v1080
        %v1123 = vunpack.c.l.b16 %v1081
        %v1124 = vunpack.c.l.b16 %v1082
        %v1125 = vunpack.c.l.b16 %v1083
        %v1126 = vunpack.c.l.b16 %v1084
        %v1127 = vunpack.c.l.b16 %v1085
        %v1128 = vunpack.c.l.b16 %v1086
        %v1129 = vunpack.c.l.b16 %v1087
        %v1130 = vunpack.c.l.b16 %v1088
        %v1131 = vpack.c.b16 %v1116, %v1115
        %v1132 = vpack.c.b16 %v1118, %v1117
        %v1133 = vpack.c.b16 %v1120, %v1119
        %v1134 = vpack.c.b16 %v1122, %v1121
        %v1135 = vpack.c.b16 %v1124, %v1123
        %v1136 = vpack.c.b16 %v1126, %v1125
        %v1137 = vpack.c.b16 %v1128, %v1127
        %v1138 = vpack.c.b16 %v1130, %v1129
        %1147 = vmatprep.subr.bf16.mxu0 0
        %1148 = vmatpush1.bf16.msra.mxu0 %v1131
        %1149 = vmatprep.subr.bf16.mxu0 0
        %1150 = vmatpush1.bf16.msra.mxu0 %v1132
        %1151 = vmatprep.subr.bf16.mxu0 0
        %1152 = vmatpush1.bf16.msra.mxu0 %v1133
        %1153 = vmatprep.subr.bf16.mxu0 0
        %1154 = vmatpush1.bf16.msra.mxu0 %v1134
        %1155 = vmatprep.subr.bf16.mxu0 0
        %1156 = vmatpush1.bf16.msra.mxu0 %v1135
        %1157 = vmatprep.subr.bf16.mxu0 0
        %1158 = vmatpush1.bf16.msra.mxu0 %v1136
        %1159 = vmatprep.subr.bf16.mxu0 0
        %1160 = vmatpush1.bf16.msra.mxu0 %v1137
        %1161 = vmatprep.subr.bf16.mxu0 0
        %1162 = vmatpush1.bf16.msra.mxu0 %v1138
        %1163 = vmatprep.subr.bf16.mxu0 0
        %1164 = vmatpush1.bf16.msra.mxu0 0
        %1165 = vmatprep.subr.bf16.mxu0 0
        %1166 = vmatpush1.bf16.msra.mxu0 0
        %1167 = vmatprep.subr.bf16.mxu0 0
        %1168 = vmatpush1.bf16.msra.mxu0 0
        %1169 = vmatprep.subr.bf16.mxu0 0
        %1170 = vmatpush1.bf16.msra.mxu0 0
        %1171 = vmatprep.subr.bf16.mxu0 0
        %1172 = vmatpush1.bf16.msra.mxu0 0
        %1173 = vmatprep.subr.bf16.mxu0 0
        %1174 = vmatpush1.bf16.msra.mxu0 0
        %1175 = vmatprep.subr.bf16.mxu0 0
        %1176 = vmatpush1.bf16.msra.mxu0 0
        %1177 = vmatprep.subr.bf16.mxu0 0
        %1178 = vmatpush1.bf16.msra.mxu0 0
        %1179 = vmatprep.mubr.bf16.mxu0 0
        %1180 = vmatmul.mubr.bf16.gmra.mrb[0].mxu0 %v1097
        %v1181 = vpop.f32.mrb[0].mxu0
        %v1182 = vadd.f32 0.0, %v1181
        %v1183 = vpop.f32.mrb[0].mxu0
        %v1184 = vpop.f32.mrb[0].mxu0
        %v1185 = vadd.f32 0.0, %v1184
        %v1186 = vpop.f32.mrb[0].mxu0
        %1187 = vdwg.mxu0
        %v1188 = vadd.f32 %v1064, %v1182
        %v1189 = vadd.f32 %v1067, %v1185
        %v1190 = vld [vmem:[%s5] sm:$0x1]
        %v1192 = vlaneseq
        %v1193 = vshrl.u32 %v1192, 7
        %v1194 = vsub.s32 0, %v1193
        %v1195 = vrot.slane %v1190, %v1194
        %v1197 = vadd.f32 %v1188, %v1195
        %v1198 = vadd.f32 %v1189, %v1195
        %s1199 = sld [smem:[#allocation4 + $0x1]]
        %vm1200 = vcmp.ge.f32.partialorder %v1197, 0.0
        %vm1201 = vcmp.ge.f32.partialorder %v1198, 0.0
        %v1202 = vstv %s1199
        %v1203 = vmul.f32 %v1202, %v1197
        %v1204 = vmul.f32 %v1202, %v1198
        %v1205 = vsel %vm1200, %v1197, %v1203
        %v1206 = vsel %vm1201, %v1198, %v1204
        %v1207 = vadd.f32 %v426, %v1205
        %v1208 = vadd.f32 %v429, %v1206
        %1209 = vst [vmem:[%s315] sm:$0xff] %v1207
        %1210 = vst [vmem:[%s315 + $0x8] sm:$0xff] %v1208
        %p1211 = scmp.lt.s32.totalorder %s27, 1
        %s1212 = scalar_select %p1211, %s27, 1
        %s1213 = smul.addr %s1212, 2
        %s1214 = smul.addr %s1213, 8
        %s1215 = scalar_lea.vmem %s8, %s1214
        // Predicated region
        $region57: #{temporal_conv_block_forward.1} parent=47 // pred_check
          %p1216 = pneg %p197
        $region58: #{temporal_conv_block_forward.1} parent=47 // pred_check_branch
          %1218 = sbr.rel (%p1216) target = $region60
        $region59: #{temporal_conv_block_forward.1} parent=47 // pred_region
          _
        $region60: #{temporal_conv_block_forward.1} parent=47 // pred_fallthru
          _
      $region48: #{temporal_conv_block_forward.1} parent=5 // pred_fallthru
        _
      %p1219 = scmp.le.s32.totalorder 2, %s22
      // Predicated region
      $region61: #{temporal_conv_block_forward.1} parent=5 // pred_check
        %p1220 = pneg %p1219
      $region62: #{temporal_conv_block_forward.1} parent=5 // pred_check_branch
        %1222 = sbr.rel (%p1220) target = $region64
      $region63: #{temporal_conv_block_forward.1} parent=5 // pred_region
        %s1223 = ssub.s32 %s22, 2
        // Predicated region
        $region65: #{temporal_conv_block_forward.1} parent=63 // pred_check
          %p1224 = pneg %p203
        $region66: #{temporal_conv_block_forward.1} parent=63 // pred_check_branch
          %1226 = sbr.rel (%p1224) target = $region68
        $region67: #{temporal_conv_block_forward.1} parent=63 // pred_region
          %p1227 = scmp.lt.s32.totalorder %s28, 1
          %s1228 = scalar_select %p1227, %s28, 1
          %s1229 = smul.addr %s1228, 2
          %s1230 = smul.addr %s1229, 8
          %s1231 = scalar_lea.vmem %s8, %s1230
        $region68: #{temporal_conv_block_forward.1} parent=63 // pred_fallthru
          _
      $region64: #{temporal_conv_block_forward.1} parent=5 // pred_fallthru
        _
    $region6: #{temporal_conv_block_forward.1} parent=1 // loop_footer
      %s26 = sadd.s32 1, %s22
    $region7: #{temporal_conv_block_forward.1} parent=1 // loop_footer_branch
      %21 = sbr.rel target = $region3
    $region8: #{temporal_conv_block_forward.1} parent=1 // loop_exit
      _
    %1232 = vsyncpa [#allocation6], 1
    %s1233 = scalar_lea.sflag [#allocation6], 1
    %1234 = vsyncpa %s1233, 1
    %1235 = vsyncpa [#allocation8], 1

</llo_original>
